<compile_context>
chip_gen: v5e
topology: v5e:2x2
jax: 0.10.0
libtpu: 0.0.40
codegen_flags: <defaults>
</compile_context>

<pallas_src>
import jax
import jax.numpy as jnp
from jax.experimental import pallas as pl
from jax.experimental.pallas import tpu as pltpu

LANE = 128


def _round_up(n, m):
    return ((n + m - 1) // m) * m


# ----------------------------------------------------------------------------
# Pallas kernel: mean-pool(T) + Linear + ReLU + Linear, lane-dense output.
# ----------------------------------------------------------------------------
def _speaker_embed_kernel(x_ref, w1_ref, b1_ref, w2_ref, b2_ref, o_ref):
    # x_ref:  (B, T, F) f32
    # w1_ref: (F, Hp)  bf16     b1_ref: (1, Hp) f32
    # w2_ref: (Hp, Ep) bf16     b2_ref: (1, Ep) f32
    # o_ref:  (B, Ep)  f32
    inv_t = 1.0 / x_ref.shape[1]                       # static at trace time
    # Temporal mean-pool: sublane/XLU reduction, exact in f32, ~free next to MXU.
    pooled = jnp.sum(x_ref[...], axis=1) * inv_t       # (B, F) f32
    # First linear on the MXU (bf16 operands, f32 accumulation) + f32 epilogue.
    h = jnp.dot(pooled.astype(jnp.bfloat16), w1_ref[...],
                preferred_element_type=jnp.float32)    # (B, Hp) f32
    h = jnp.maximum(h + b1_ref[...], 0.0)              # bias + ReLU in f32 (VPU)
    # Second linear -> padded speaker embedding.
    e = jnp.dot(h.astype(jnp.bfloat16), w2_ref[...],
                preferred_element_type=jnp.float32) + b2_ref[...]   # (B, Ep) f32
    o_ref[...] = e.astype(o_ref.dtype)


def _speaker_embed_pallas(x, w1_bf, b1p, w2_bf, b2p):
    """One no-grid pallas_call; all operands whole-array resident in VMEM."""
    B, T, F = x.shape
    Hp = w1_bf.shape[1]
    Ep = w2_bf.shape[1]
    vmem = lambda: pl.BlockSpec(memory_space=pltpu.MemorySpace.VMEM)

    flops = B * T * F + 2 * B * F * Hp + 2 * B * Hp * Ep
    bytes_accessed = (x.size * x.dtype.itemsize
                      + w1_bf.size * w1_bf.dtype.itemsize
                      + b1p.size * b1p.dtype.itemsize
                      + w2_bf.size * w2_bf.dtype.itemsize
                      + b2p.size * b2p.dtype.itemsize
                      + B * Ep * 4)

    return pl.pallas_call(
        _speaker_embed_kernel,
        out_shape=jax.ShapeDtypeStruct((B, Ep), jnp.float32),
        in_specs=[vmem() for _ in range(5)],
        out_specs=vmem(),
        cost_estimate=pl.CostEstimate(flops=flops, transcendentals=0,
                                      bytes_accessed=bytes_accessed),
    )(x, w1_bf, b1p, w2_bf, b2p)


# ----------------------------------------------------------------------------
# The wrapped module (synthetic SpeakerNet stand-in) and the WrappedModel
# ----------------------------------------------------------------------------
class SyntheticSpeakerModule:
    """Synthetic inner `model`: pool(T) -> Linear(F,H) -> ReLU -> Linear(H,E)."""

    def __init__(self, feat_dim, hidden_dim, embed_dim, key):
        k1, k2, k3, k4 = jax.random.split(key, 4)
        self.F, self.H, self.E = feat_dim, hidden_dim, embed_dim
        self.Hp = _round_up(hidden_dim, LANE)
        self.Ep = _round_up(embed_dim, LANE)

        # Deterministic in-script initialization (no checkpoint loading).
        w1 = (jax.random.normal(k1, (feat_dim, hidden_dim), jnp.float32)
              / jnp.sqrt(feat_dim))
        b1 = 0.1 * jax.random.normal(k3, (hidden_dim,), jnp.float32)
        w2 = (jax.random.normal(k2, (hidden_dim, embed_dim), jnp.float32)
              / jnp.sqrt(hidden_dim))
        b2 = 0.1 * jax.random.normal(k4, (embed_dim,), jnp.float32)

        # Unpadded f32 params (reference / external interface).
        self.w1, self.b1, self.w2, self.b2 = w1, b1, w2, b2

        # Lane-padded params (H -> Hp, E -> Ep), zero pad => sliced output is
        # exactly the unpadded computation.  Weights pre-cast to bf16 ONCE here
        # (hoisted out of the per-call path); biases stay f32 for the VPU epilogue.
        w1_pad = (jnp.zeros((feat_dim, self.Hp), jnp.float32)
                  .at[:, :hidden_dim].set(w1))
        w2_pad = (jnp.zeros((self.Hp, self.Ep), jnp.float32)
                  .at[:hidden_dim, :embed_dim].set(w2))
        self.w1_bf = w1_pad.astype(jnp.bfloat16)                  # (F, Hp)
        self.w2_bf = w2_pad.astype(jnp.bfloat16)                  # (Hp, Ep)
        self.b1_pad = (jnp.zeros((1, self.Hp), jnp.float32)
                       .at[:, :hidden_dim].set(b1))
        self.b2_pad = (jnp.zeros((1, self.Ep), jnp.float32)
                       .at[:, :embed_dim].set(b2))

    def __call__(self, x, label=None):
        # `label` is accepted (mirrors the PyTorch call signature) but the
        # synthetic inner model, like an inference-time SpeakerNet, ignores it.
        B, T, F = x.shape
        assert F == self.F
        out_pad = _speaker_embed_pallas(x, self.w1_bf, self.b1_pad,
                                        self.w2_bf, self.b2_pad)
        # Slice padded lanes back to E for the external (B, E) contract.
        # TODO(synk): fuse this slice into the downstream consumer when this
        # module is embedded in a larger graph (keeps the output path unmasked).
        return out_pad[:, :self.E]


class WrappedModel:
    """Faithful port of the PyTorch WrappedModel: pure delegation."""

    def __init__(self, model):
        self.module = model

    def __call__(self, x, label=None):
        return self.module(x, label)


# Pure-JAX f32 reference (unpadded) for correctness checking.
def _reference(x, w1, b1, w2, b2):
    pooled = jnp.mean(x, axis=1)
    h = jnp.maximum(pooled @ w1 + b1[None, :], 0.0)
    return h @ w2 + b2[None, :]


if __name__ == "__main__":
    key = jax.random.PRNGKey(0)
    k_x, k_params = jax.random.split(key)

    B, T, F, H, E = 8, 16, 32, 64, 32
    x = jax.random.normal(k_x, (B, T, F), jnp.float32)

    inner = SyntheticSpeakerModule(F, H, E, k_params)
    model = WrappedModel(inner)

    out = model(x)                       # label defaults to None, as in PyTorch
    out = jax.block_until_ready(out)

    ref = _reference(x, inner.w1, inner.b1, inner.w2, inner.b2)
    assert out.shape == (B, E)
    # bf16 matmul operands with f32 accumulation -> ~1% relative tolerance.
    assert jnp.allclose(out, ref, atol=3e-2, rtol=3e-2), \
        float(jnp.max(jnp.abs(out - ref)))

    print("KERNEL_OK")
</pallas_src>

<mosaic_0001>
module attributes {stable_mosaic.version = 11 : i64} {
  func.func @_speaker_embed_kernel(%arg0: memref<8x16x32xf32, #tpu.memory_space<vmem>>, %arg1: memref<32x128xbf16, #tpu.memory_space<vmem>>, %arg2: memref<1x128xf32, #tpu.memory_space<vmem>>, %arg3: memref<128x128xbf16, #tpu.memory_space<vmem>>, %arg4: memref<1x128xf32, #tpu.memory_space<vmem>>, %arg5: memref<8x128xf32, #tpu.memory_space<vmem>>) attributes {dimension_semantics = [], scalar_prefetch = 0 : i64, scratch_operands = 0 : i64, tpu.core_type = #tpu.core_type<tc>} {
    %c0 = arith.constant 0 : index
    %c0_0 = arith.constant 0 : index
    %c0_1 = arith.constant 0 : index
    %0 = vector.load %arg0[%c0, %c0_0, %c0_1] : memref<8x16x32xf32, #tpu.memory_space<vmem>>, vector<8x16x32xf32>
    %cst = arith.constant dense<0.000000e+00> : vector<8x32xf32>
    %1 = vector.multi_reduction <add>, %0, %cst [1] : vector<8x16x32xf32> to vector<8x32xf32>
    %cst_2 = arith.constant 6.250000e-02 : f32
    %2 = vector.broadcast %cst_2 : f32 to vector<8x32xf32>
    %3 = arith.mulf %1, %2 : vector<8x32xf32>
    %4 = arith.truncf %3 : vector<8x32xf32> to vector<8x32xbf16>
    %c0_3 = arith.constant 0 : index
    %c0_4 = arith.constant 0 : index
    %5 = vector.load %arg1[%c0_3, %c0_4] : memref<32x128xbf16, #tpu.memory_space<vmem>>, vector<32x128xbf16>
    %cst_5 = arith.constant dense<0.000000e+00> : vector<8x128xf32>
    %6 = tpu.matmul %4, %5, %cst_5 {dimension_numbers = #tpu.dot_dimension_numbers<[1], [0], [0], [1], [0, 0, 1, 1], [], []>} : vector<8x32xbf16>, vector<32x128xbf16>, vector<8x128xf32> -> vector<8x128xf32>
    %c0_6 = arith.constant 0 : index
    %c0_7 = arith.constant 0 : index
    %7 = vector.load %arg2[%c0_6, %c0_7] : memref<1x128xf32, #tpu.memory_space<vmem>>, vector<1x128xf32>
    %8 = vector.broadcast %7 : vector<1x128xf32> to vector<8x128xf32>
    %9 = arith.addf %6, %8 : vector<8x128xf32>
    %cst_8 = arith.constant 0.000000e+00 : f32
    %10 = vector.broadcast %cst_8 : f32 to vector<8x128xf32>
    %11 = arith.maximumf %9, %10 : vector<8x128xf32>
    %12 = arith.truncf %11 : vector<8x128xf32> to vector<8x128xbf16>
    %c0_9 = arith.constant 0 : index
    %c0_10 = arith.constant 0 : index
    %13 = vector.load %arg3[%c0_9, %c0_10] : memref<128x128xbf16, #tpu.memory_space<vmem>>, vector<128x128xbf16>
    %cst_11 = arith.constant dense<0.000000e+00> : vector<8x128xf32>
    %14 = tpu.matmul %12, %13, %cst_11 {dimension_numbers = #tpu.dot_dimension_numbers<[1], [0], [0], [1], [0, 0, 1, 1], [], []>} : vector<8x128xbf16>, vector<128x128xbf16>, vector<8x128xf32> -> vector<8x128xf32>
    %c0_12 = arith.constant 0 : index
    %c0_13 = arith.constant 0 : index
    %15 = vector.load %arg4[%c0_12, %c0_13] : memref<1x128xf32, #tpu.memory_space<vmem>>, vector<1x128xf32>
    %16 = vector.broadcast %15 : vector<1x128xf32> to vector<8x128xf32>
    %17 = arith.addf %14, %16 : vector<8x128xf32>
    %c0_14 = arith.constant 0 : index
    %c0_15 = arith.constant 0 : index
    %18 = vector.load %arg5[%c0_14, %c0_15] : memref<8x128xf32, #tpu.memory_space<vmem>>, vector<8x128xf32>
    tpu.vector_store %arg5[%c0_14, %c0_15], %17 {strides = array<i32>} : memref<8x128xf32, #tpu.memory_space<vmem>>, vector<8x128xf32>,
    return
  }
}

</mosaic_0001>

<llo_original>
// kernel: tpu_custom_call.1
$region0: #{tpu_custom_call.1}
  #allocation0 [shape = 'u32[]', space=smem, size = 0x4, offset = 0x4, fixed_abs, tag = 'smem constant byte address 0x4 - core index']
  #allocation1 [shape = 'u32[72,128]{1,0:T(1,128)}', space=vmem, size = 0x9000, scoped, tag = 'internal scratch']
  %s0 = inlined_call_operand.hbm [shape: f32[8,16,32], index: 0, kind: input, shape index: {}]
  %s1 = inlined_call_operand.hbm [shape: bf16[32,128], index: 1, kind: input, shape index: {}]
  %s2 = inlined_call_operand.vmem [shape: f32[1,128], index: 2, kind: input, shape index: {}]
  %s3 = inlined_call_operand.hbm [shape: bf16[128,128], index: 3, kind: input, shape index: {}]
  %s4 = inlined_call_operand.vmem [shape: f32[1,128], index: 4, kind: input, shape index: {}]
  %s5 = inlined_call_operand.hbm [shape: f32[8,128], index: 5, kind: output, shape index: {}]
  %s6 = sld [smem:[#allocation0]]
  $region42: #{tpu_custom_call.1} parent=0
    _
  %s8 = ssub.s32 1, %s6
  %s9 = scalar_select 0, %s8, %s6
  $region1: #{tpu_custom_call.1} parent=0
    #allocation2 [shape = 'u8[65536]{0}', space=vmem, size = 0x10000, scoped, tag = 'input window, operand 0, single buffered']
    #allocation3 [shape = 's32[1]{0}', space=sflag, size = 0x4, scoped, tag = 'scoped memory for tpu_custom_call.1']
    #allocation4 [shape = 's32[1]{0}', space=sflag, size = 0x4, scoped, tag = 'scoped memory for tpu_custom_call.1']
    #allocation5 [shape = 'u8[8192]{0}', space=vmem, size = 0x2000, scoped, tag = 'input window, operand 1, single buffered']
    #allocation6 [shape = 's32[1]{0}', space=sflag, size = 0x4, scoped, tag = 'scoped memory for tpu_custom_call.1']
    #allocation7 [shape = 'u8[32768]{0}', space=vmem, size = 0x8000, scoped, tag = 'input window, operand 3, single buffered']
    #allocation8 [shape = 'u8[4096]{0}', space=vmem, size = 0x1000, scoped, tag = 'output window, operand 0, single buffered']
    %10 = vsyncpa [#allocation3], 0
    %11 = vsyncpa [#allocation6], 0
    %12 = vsyncpa [#allocation4], 0
    // Predicated region
    $region2: #{tpu_custom_call.1} parent=1 // pred_check
      _
    $region3: #{tpu_custom_call.1} parent=1 // pred_check_branch
      %14 = sbr.rel (0) target = $region5
    $region4: #{tpu_custom_call.1} parent=1 // pred_region
      %16 = vsyncadd [#allocation3], 0
      %s17 = sshll.u32 %s0, 4
      %s18 = int_to_ptr.hbm [resolvable:$true] %s17
      %s19 = sshll.u32 [#allocation2], 4
      %s20 = int_to_ptr.vmem [resolvable:$true] %s19
      %25 = dma.hbm_to_vmem [thread:$0]  %s18, 2048, %s20, [#allocation3], 128, 128, 8
    $region5: #{tpu_custom_call.1} parent=1 // pred_fallthru
      _
    // Predicated region
    $region6: #{tpu_custom_call.1} parent=1 // pred_check
      _
    $region7: #{tpu_custom_call.1} parent=1 // pred_check_branch
      %27 = sbr.rel (0) target = $region9
    $region8: #{tpu_custom_call.1} parent=1 // pred_region
      %29 = vsyncadd [#allocation6], 0
      %s30 = sshll.u32 %s1, 4
      %s31 = int_to_ptr.hbm [resolvable:$true] %s30
      %s32 = sshll.u32 [#allocation5], 4
      %s33 = int_to_ptr.vmem [resolvable:$true] %s32
      %38 = dma.hbm_to_vmem [thread:$0]  %s31, 256, %s33, [#allocation6], 64, 64, 4
    $region9: #{tpu_custom_call.1} parent=1 // pred_fallthru
      _
    // Predicated region
    $region10: #{tpu_custom_call.1} parent=1 // pred_check
      _
    $region11: #{tpu_custom_call.1} parent=1 // pred_check_branch
      %40 = sbr.rel (0) target = $region13
    $region12: #{tpu_custom_call.1} parent=1 // pred_region
      _
    $region13: #{tpu_custom_call.1} parent=1 // pred_fallthru
      _
    // Predicated region
    $region14: #{tpu_custom_call.1} parent=1 // pred_check
      _
    $region15: #{tpu_custom_call.1} parent=1 // pred_check_branch
      %42 = sbr.rel (0) target = $region17
    $region16: #{tpu_custom_call.1} parent=1 // pred_region
      %44 = vsyncadd [#allocation6], 0
      %s45 = sshll.u32 %s3, 4
      %s46 = int_to_ptr.hbm [resolvable:$true] %s45
      %s47 = sshll.u32 [#allocation7], 4
      %s48 = int_to_ptr.vmem [resolvable:$true] %s47
      %53 = dma.hbm_to_vmem [thread:$0]  %s46, 1024, %s48, [#allocation6], 64, 64, 4
    $region17: #{tpu_custom_call.1} parent=1 // pred_fallthru
      _
    // Predicated region
    $region18: #{tpu_custom_call.1} parent=1 // pred_check
      _
    $region19: #{tpu_custom_call.1} parent=1 // pred_check_branch
      %55 = sbr.rel (0) target = $region21
    $region20: #{tpu_custom_call.1} parent=1 // pred_region
      _
    $region21: #{tpu_custom_call.1} parent=1 // pred_fallthru
      _
    // Predicated region
    $region22: #{tpu_custom_call.1} parent=1 // pred_check
      _
    $region23: #{tpu_custom_call.1} parent=1 // pred_check_branch
      %57 = sbr.rel (0) target = $region25
    $region24: #{tpu_custom_call.1} parent=1 // pred_region
      %59 = dma.done [#allocation3], 2048
    $region25: #{tpu_custom_call.1} parent=1 // pred_fallthru
      _
    // Predicated region
    $region26: #{tpu_custom_call.1} parent=1 // pred_check
      _
    $region27: #{tpu_custom_call.1} parent=1 // pred_check_branch
      %61 = sbr.rel (0) target = $region29
    $region28: #{tpu_custom_call.1} parent=1 // pred_region
      %63 = dma.done [#allocation6], 256
    $region29: #{tpu_custom_call.1} parent=1 // pred_fallthru
      _
    // Predicated region
    $region30: #{tpu_custom_call.1} parent=1 // pred_check
      _
    $region31: #{tpu_custom_call.1} parent=1 // pred_check_branch
      %65 = sbr.rel (0) target = $region33
    $region32: #{tpu_custom_call.1} parent=1 // pred_region
      %67 = dma.done [#allocation6], 1024
    $region33: #{tpu_custom_call.1} parent=1 // pred_fallthru
      _
    %v69 = vld [vmem:[#allocation2] sm:$0xff]
    %v70 = vld [vmem:[#allocation2 + $0x8] sm:$0xff]
    %v71 = vld [vmem:[#allocation2 + $0x10] sm:$0xff]
    %v72 = vld [vmem:[#allocation2 + $0x18] sm:$0xff]
    %v73 = vld [vmem:[#allocation2 + $0x20] sm:$0xff]
    %v74 = vld [vmem:[#allocation2 + $0x28] sm:$0xff]
    %v75 = vld [vmem:[#allocation2 + $0x30] sm:$0xff]
    %v76 = vld [vmem:[#allocation2 + $0x38] sm:$0xff]
    %v77 = vld [vmem:[#allocation2 + $0x40] sm:$0xff]
    %v78 = vld [vmem:[#allocation2 + $0x48] sm:$0xff]
    %v79 = vld [vmem:[#allocation2 + $0x50] sm:$0xff]
    %v80 = vld [vmem:[#allocation2 + $0x58] sm:$0xff]
    %v81 = vld [vmem:[#allocation2 + $0x60] sm:$0xff]
    %v82 = vld [vmem:[#allocation2 + $0x68] sm:$0xff]
    %v83 = vld [vmem:[#allocation2 + $0x70] sm:$0xff]
    %v84 = vld [vmem:[#allocation2 + $0x78] sm:$0xff]
    %vm85 = vcmask 261120
    %v86 = vsel %vm85, %v69, 0.0
    %v87 = vsel %vm85, %v70, 0.0
    %v88 = vadd.f32 %v86, %v87
    %v89 = vrot.slane %v88, 4
    %v90 = vadd.f32 %v88, %v89
    %v91 = vrot.slane %v90, 2
    %v92 = vadd.f32 %v90, %v91
    %v93 = vrot.slane %v92, 1
    %v94 = vadd.f32 %v92, %v93
    %v95 = vsel %vm85, %v71, 0.0
    %v96 = vsel %vm85, %v72, 0.0
    %v97 = vadd.f32 %v95, %v96
    %v98 = vrot.slane %v97, 4
    %v99 = vadd.f32 %v97, %v98
    %v100 = vrot.slane %v99, 2
    %v101 = vadd.f32 %v99, %v100
    %v102 = vrot.slane %v101, 1
    %v103 = vadd.f32 %v101, %v102
    %v104 = vsel %vm85, %v73, 0.0
    %v105 = vsel %vm85, %v74, 0.0
    %v106 = vadd.f32 %v104, %v105
    %v107 = vrot.slane %v106, 4
    %v108 = vadd.f32 %v106, %v107
    %v109 = vrot.slane %v108, 2
    %v110 = vadd.f32 %v108, %v109
    %v111 = vrot.slane %v110, 1
    %v112 = vadd.f32 %v110, %v111
    %v113 = vsel %vm85, %v75, 0.0
    %v114 = vsel %vm85, %v76, 0.0
    %v115 = vadd.f32 %v113, %v114
    %v116 = vrot.slane %v115, 4
    %v117 = vadd.f32 %v115, %v116
    %v118 = vrot.slane %v117, 2
    %v119 = vadd.f32 %v117, %v118
    %v120 = vrot.slane %v119, 1
    %v121 = vadd.f32 %v119, %v120
    %v122 = vsel %vm85, %v77, 0.0
    %v123 = vsel %vm85, %v78, 0.0
    %v124 = vadd.f32 %v122, %v123
    %v125 = vrot.slane %v124, 4
    %v126 = vadd.f32 %v124, %v125
    %v127 = vrot.slane %v126, 2
    %v128 = vadd.f32 %v126, %v127
    %v129 = vrot.slane %v128, 1
    %v130 = vadd.f32 %v128, %v129
    %v131 = vsel %vm85, %v79, 0.0
    %v132 = vsel %vm85, %v80, 0.0
    %v133 = vadd.f32 %v131, %v132
    %v134 = vrot.slane %v133, 4
    %v135 = vadd.f32 %v133, %v134
    %v136 = vrot.slane %v135, 2
    %v137 = vadd.f32 %v135, %v136
    %v138 = vrot.slane %v137, 1
    %v139 = vadd.f32 %v137, %v138
    %v140 = vsel %vm85, %v81, 0.0
    %v141 = vsel %vm85, %v82, 0.0
    %v142 = vadd.f32 %v140, %v141
    %v143 = vrot.slane %v142, 4
    %v144 = vadd.f32 %v142, %v143
    %v145 = vrot.slane %v144, 2
    %v146 = vadd.f32 %v144, %v145
    %v147 = vrot.slane %v146, 1
    %v148 = vadd.f32 %v146, %v147
    %v149 = vsel %vm85, %v83, 0.0
    %v150 = vsel %vm85, %v84, 0.0
    %v151 = vadd.f32 %v149, %v150
    %v152 = vrot.slane %v151, 4
    %v153 = vadd.f32 %v151, %v152
    %v154 = vrot.slane %v153, 2
    %v155 = vadd.f32 %v153, %v154
    %v156 = vrot.slane %v155, 1
    %v157 = vadd.f32 %v155, %v156
    %v158 = vmul.f32 %v94, 0.0625
    %v159 = vmul.f32 %v103, 0.0625
    %v160 = vmul.f32 %v112, 0.0625
    %v161 = vmul.f32 %v121, 0.0625
    %v162 = vmul.f32 %v130, 0.0625
    %v163 = vmul.f32 %v139, 0.0625
    %v164 = vmul.f32 %v148, 0.0625
    %v165 = vmul.f32 %v157, 0.0625
    %v166 = vpack.c.bf16 %v158, %v158
    %v167 = vpack.c.bf16 %v159, %v159
    %v168 = vpack.c.bf16 %v160, %v160
    %v169 = vpack.c.bf16 %v161, %v161
    %v170 = vpack.c.bf16 %v162, %v162
    %v171 = vpack.c.bf16 %v163, %v163
    %v172 = vpack.c.bf16 %v164, %v164
    %v173 = vpack.c.bf16 %v165, %v165
    %v174 = vld [vmem:[#allocation5] sm:$0xf]
    %v175 = vld [vmem:[#allocation5 + $0x4] sm:$0xf]
    %v176 = vld [vmem:[#allocation5 + $0x8] sm:$0xf]
    %v177 = vld [vmem:[#allocation5 + $0xc] sm:$0xf]
    %v178 = vld [vmem:[%s2] sm:$0x1]
    %v180 = vperm.slane %v178, 0
    %v190 = vunpack.c.l.b16 %v166
    %v191 = vunpack.c.l.b16 %v167
    %v192 = vunpack.c.l.b16 %v168
    %v193 = vunpack.c.l.b16 %v169
    %v194 = vunpack.c.l.b16 %v170
    %v195 = vunpack.c.l.b16 %v171
    %v196 = vunpack.c.l.b16 %v172
    %v197 = vunpack.c.l.b16 %v173
    %vm198 = vcmask 1041409
    %v199 = vsel %vm198, %v191, %v190
    %vm200 = vcmask 1042434
    %v201 = vsel %vm200, %v192, %v199
    %vm202 = vcmask 1043459
    %v203 = vsel %vm202, %v193, %v201
    %vm204 = vcmask 1044484
    %v205 = vsel %vm204, %v194, %v203
    %vm206 = vcmask 1045509
    %v207 = vsel %vm206, %v195, %v205
    %vm208 = vcmask 1046534
    %v209 = vsel %vm208, %v196, %v207
    %vm210 = vcmask 1047559
    %v211 = vsel %vm210, %v197, %v209
    %v212 = vpack.c.b16 %v211, %v211
    %v217 = vunpack.c.l.b16 %v174
    %v218 = vunpack.c.l.b16 %v175
    %v219 = vunpack.c.l.b16 %v176
    %v220 = vunpack.c.l.b16 %v177
    %v221 = vpack.c.b16 %v218, %v217
    %v222 = vpack.c.b16 %v220, %v219
    %v226 = vsel %vm85, %v212, 0
    %228 = vmatpush.bf16.msra.mxu0 0
    %229 = vmatpush.bf16.msra.mxu0 0
    %230 = vmatpush.bf16.msra.mxu0 0
    %231 = vmatpush.bf16.msra.mxu0 0
    %232 = vmatpush.bf16.msra.mxu0 0
    %233 = vmatpush.bf16.msra.mxu0 0
    %234 = vmatpush.bf16.msra.mxu0 %v222
    %235 = vmatpush.bf16.msra.mxu0 %v221
    %236 = vmatmul.bf16.gmra.mxu0 %v226
    %v237 = vpop.f32.mrf.mxu0
    %v238 = vadd.f32 %v180, %v237
    %v239 = vpop.f32.mrf.mxu0
    %240 = vdwg.mxu0
    %v241 = vmax.f32 %v238, 0.0
    %v242 = vpack.c.bf16 %v241, %v241
    %v243 = vld [vmem:[#allocation7] sm:$0xf]
    %v244 = vld [vmem:[#allocation7 + $0x4] sm:$0xf]
    %v245 = vld [vmem:[#allocation7 + $0x8] sm:$0xf]
    %v246 = vld [vmem:[#allocation7 + $0xc] sm:$0xf]
    %v247 = vld [vmem:[#allocation7 + $0x10] sm:$0xf]
    %v248 = vld [vmem:[#allocation7 + $0x14] sm:$0xf]
    %v249 = vld [vmem:[#allocation7 + $0x18] sm:$0xf]
    %v250 = vld [vmem:[#allocation7 + $0x1c] sm:$0xf]
    %v251 = vld [vmem:[#allocation7 + $0x20] sm:$0xf]
    %v252 = vld [vmem:[#allocation7 + $0x24] sm:$0xf]
    %v253 = vld [vmem:[#allocation7 + $0x28] sm:$0xf]
    %v254 = vld [vmem:[#allocation7 + $0x2c] sm:$0xf]
    %v255 = vld [vmem:[#allocation7 + $0x30] sm:$0xf]
    %v256 = vld [vmem:[#allocation7 + $0x34] sm:$0xf]
    %v257 = vld [vmem:[#allocation7 + $0x38] sm:$0xf]
    %v258 = vld [vmem:[#allocation7 + $0x3c] sm:$0xf]
    %v259 = vld [vmem:[%s4] sm:$0x1]
    %v261 = vperm.slane %v259, 0
    %v279 = vunpack.c.l.b16 %v243
    %v280 = vunpack.c.l.b16 %v244
    %v281 = vunpack.c.l.b16 %v245
    %v282 = vunpack.c.l.b16 %v246
    %v283 = vunpack.c.l.b16 %v247
    %v284 = vunpack.c.l.b16 %v248
    %v285 = vunpack.c.l.b16 %v249
    %v286 = vunpack.c.l.b16 %v250
    %v287 = vunpack.c.l.b16 %v251
    %v288 = vunpack.c.l.b16 %v252
    %v289 = vunpack.c.l.b16 %v253
    %v290 = vunpack.c.l.b16 %v254
    %v291 = vunpack.c.l.b16 %v255
    %v292 = vunpack.c.l.b16 %v256
    %v293 = vunpack.c.l.b16 %v257
    %v294 = vunpack.c.l.b16 %v258
    %v295 = vpack.c.b16 %v280, %v279
    %v296 = vpack.c.b16 %v282, %v281
    %v297 = vpack.c.b16 %v284, %v283
    %v298 = vpack.c.b16 %v286, %v285
    %v299 = vpack.c.b16 %v288, %v287
    %v300 = vpack.c.b16 %v290, %v289
    %v301 = vpack.c.b16 %v292, %v291
    %v302 = vpack.c.b16 %v294, %v293
    %311 = vmatpush.bf16.msra.mxu0 %v302
    %312 = vmatpush.bf16.msra.mxu0 %v301
    %313 = vmatpush.bf16.msra.mxu0 %v300
    %314 = vmatpush.bf16.msra.mxu0 %v299
    %315 = vmatpush.bf16.msra.mxu0 %v298
    %316 = vmatpush.bf16.msra.mxu0 %v297
    %317 = vmatpush.bf16.msra.mxu0 %v296
    %318 = vmatpush.bf16.msra.mxu0 %v295
    %319 = vmatmul.bf16.gmra.mxu0 %v242
    %v320 = vpop.f32.mrf.mxu0
    %v321 = vadd.f32 %v261, %v320
    %v322 = vpop.f32.mrf.mxu0
    %323 = vdwg.mxu0
    %324 = vst [vmem:[#allocation8] sm:$0xff] %v321
    // Predicated region
    $region34: #{tpu_custom_call.1} parent=1 // pred_check
      _
    $region35: #{tpu_custom_call.1} parent=1 // pred_check_branch
      %326 = sbr.rel (0) target = $region37
    $region36: #{tpu_custom_call.1} parent=1 // pred_region
      %328 = vsyncadd [#allocation4], 0
      %s330 = sshll.u32 [#allocation8], 4
      %s331 = int_to_ptr.vmem [resolvable:$true] %s330
      %s332 = sshll.u32 %s5, 4
      %s333 = int_to_ptr.hbm [resolvable:$true] %s332
      %335 = dma.vmem_to_hbm [thread:$0]  %s331, 128, %s333, [#allocation4]
    $region37: #{tpu_custom_call.1} parent=1 // pred_fallthru
      _
    // Predicated region
    $region38: #{tpu_custom_call.1} parent=1 // pred_check
      _
    $region39: #{tpu_custom_call.1} parent=1 // pred_check_branch
      %337 = sbr.rel (0) target = $region41
    $region40: #{tpu_custom_call.1} parent=1 // pred_region
      %339 = dma.done [#allocation4], 128
    $region41: #{tpu_custom_call.1} parent=1 // pred_fallthru
      _
    %340 = vsyncpa [#allocation3], 1
    %341 = vsyncpa [#allocation6], 1
    %342 = vsyncpa [#allocation4], 1

</llo_original>
